<compile_context>
chip_gen: v7x
topology: tpu7x:2x2x1
jax: 0.10.0
libtpu: 0.0.40
codegen_flags: <defaults>
</compile_context>

<pallas_src>
import functools

import jax
import jax.numpy as jnp
from jax.experimental import pallas as pl
from jax.experimental.pallas import tpu as pltpu


def _dual_opt_kernel(x_ref, wf_ref, bf_ref, w2_ref, b2_ref, o_ref, *, hidden):
    """One (TM, D) row-tile of the DualEmergenceOptimizer forward."""
    x = x_ref[...]                                    # (TM, D) f32
    xb = x.astype(jnp.bfloat16)

    # Fused first stage: x @ [W1 | Wg/T]  -> (TM, H + D), f32 accumulation.
    y = jnp.dot(xb, wf_ref[...], preferred_element_type=jnp.float32)
    y = y + bf_ref[...]                               # (TM, H + D)

    h1 = jax.nn.gelu(y[:, :hidden])                   # (TM, H) f32  (EUP tanh)
    gate = jax.nn.sigmoid(y[:, hidden:])              # (TM, D) f32  (EUP)

    # Second MLP stage: (TM, H) @ (H, D), f32 accumulation.
    h2 = jnp.dot(h1.astype(jnp.bfloat16), w2_ref[...],
                 preferred_element_type=jnp.float32)
    h2 = h2 + b2_ref[...]                             # (TM, D)

    # out = g*h + (1-g)*x  rewritten as  x + g*(h - x)
    o_ref[...] = (x + gate * (h2 - x)).astype(o_ref.dtype)


def prepare_params(params, temperature):
    """One-time, static weight transform (outside the kernel)."""
    inv_t = 1.0 / temperature
    wf = jnp.concatenate([params["w1"], params["wg"] * inv_t], axis=1)
    bf = jnp.concatenate([params["b1"], params["bg"] * inv_t], axis=1)
    return {
        "wf": wf.astype(jnp.bfloat16),             # (D, H + D)
        "bf": bf.astype(jnp.float32),              # (1, H + D)
        "w2": params["w2"].astype(jnp.bfloat16),   # (H, D)
        "b2": params["b2"].astype(jnp.float32),    # (1, D)
    }


def _vmem_capacity_bytes():
    """Generation-aware physical VMEM size (64 MiB v7x, 128 MiB v5e/v6e)."""
    try:
        return int(pltpu.get_tpu_info().vmem_capacity_bytes)
    except Exception:
        return 128 * 2 ** 20


def _tile_need_bytes(tm, D, H, weight_bytes, in_itemsize, out_itemsize):
    io_bytes = 2 * tm * D * (in_itemsize + out_itemsize)   # double-buffered in+out
    interm_bytes = 4 * tm * (H + D) * 4                    # y / h1 / gate / h2
    return weight_bytes + io_bytes + interm_bytes


def dual_emergence_optimizer(x, prepared, *, row_tile=512):
    """x: (B, S, D) float32 -> (B, S, D) float32."""
    B, S, D = x.shape
    H = prepared["w2"].shape[0]
    assert D % 128 == 0 and H % 128 == 0, "feature_dim / hidden must be 128-lane aligned"

    M = B * S
    x2 = x.reshape(M, D)

    wf, bf, w2, b2 = prepared["wf"], prepared["bf"], prepared["w2"], prepared["b2"]
    weight_bytes = wf.nbytes + bf.nbytes + w2.nbytes + b2.nbytes

    vmem_cap = _vmem_capacity_bytes()
    usable_vmem = int(vmem_cap * 0.85)          # leave headroom vs physical VMEM

    # Pick the row tile: start big (HBM-bound -> big DMA bursts), shrink only to
    # (a) keep >= 2 grid steps when M allows (v7x megacore) and (b) fit VMEM.
    tm = max(8, int(row_tile))
    while tm > 8 and M <= tm:
        tm //= 2
    while tm > 8 and (_tile_need_bytes(tm, D, H, weight_bytes, 4, 4) * 1.25
                      > usable_vmem):
        tm //= 2
    tm = max(8, tm)
    # TODO(synk): if weight_bytes alone exceeds usable_vmem (D >= ~2K on v7x),
    # switch to streamed weights with a K/N reduction grid axis (P3 pattern).

    grid_m = pl.cdiv(M, tm)                     # ragged last tile masked by Pallas

    need = _tile_need_bytes(tm, D, H, weight_bytes, 4, 4)
    vmem_limit = int(min(usable_vmem, max(32 * 2 ** 20, int(need * 1.25))))

    # Advisory cost estimate.
    flops = 2 * M * (D * (H + D) + H * D)
    transcendentals = M * (H + D)
    bytes_accessed = 2 * M * D * 4 + weight_bytes

    kernel = functools.partial(_dual_opt_kernel, hidden=H)
    weight_spec = pl.BlockSpec(memory_space=pltpu.MemorySpace.VMEM)  # resident, 1-buffered

    out2 = pl.pallas_call(
        kernel,
        out_shape=jax.ShapeDtypeStruct((M, D), x.dtype),
        grid_spec=pltpu.PrefetchScalarGridSpec(
            num_scalar_prefetch=0,
            grid=(grid_m,),
            in_specs=[
                pl.BlockSpec((tm, D), lambda i: (i, 0)),   # x row tile (pipelined)
                weight_spec,                               # [W1 | Wg/T]
                weight_spec,                               # [b1 | bg/T]
                weight_spec,                               # W2
                weight_spec,                               # b2
            ],
            out_specs=pl.BlockSpec((tm, D), lambda i: (i, 0)),
        ),
        compiler_params=pltpu.CompilerParams(
            dimension_semantics=("parallel",),
            vmem_limit_bytes=vmem_limit),
        cost_estimate=pl.CostEstimate(
            flops=flops,
            transcendentals=transcendentals,
            bytes_accessed=bytes_accessed),
    )(x2, wf, bf, w2, b2)

    return out2.reshape(B, S, D)


def init_params(key, dim, hidden):
    """Deterministic synthetic parameters (shapes implied by the module)."""
    k1, k2, k3 = jax.random.split(key, 3)
    scale1 = 1.0 / jnp.sqrt(dim)
    scale2 = 1.0 / jnp.sqrt(hidden)
    return {
        "w1": jax.random.normal(k1, (dim, hidden), jnp.float32) * scale1,
        "b1": jnp.zeros((1, hidden), jnp.float32),
        "w2": jax.random.normal(k2, (hidden, dim), jnp.float32) * scale2,
        "b2": jnp.zeros((1, dim), jnp.float32),
        "wg": jax.random.normal(k3, (dim, dim), jnp.float32) * scale1,
        "bg": jnp.zeros((1, dim), jnp.float32),
    }


def reference_forward(x, params, temperature):
    """Pure-JAX reference with the same numerics as the kernel
    (bf16 matmul operands, f32 accumulation and f32 elementwise).
    Note: jax.nn.gelu defaults to the tanh approximation (PyTorch nn.GELU
    defaults to exact erf) -- the in-file check is self-consistent."""
    B, S, D = x.shape
    x2 = x.reshape(B * S, D)
    xb = x2.astype(jnp.bfloat16)
    inv_t = 1.0 / temperature
    h1 = jnp.dot(xb, params["w1"].astype(jnp.bfloat16),
                 preferred_element_type=jnp.float32) + params["b1"]
    h = jnp.dot(jax.nn.gelu(h1).astype(jnp.bfloat16),
                params["w2"].astype(jnp.bfloat16),
                preferred_element_type=jnp.float32) + params["b2"]
    gl = jnp.dot(xb, (params["wg"] * inv_t).astype(jnp.bfloat16),
                 preferred_element_type=jnp.float32) + params["bg"] * inv_t
    g = jax.nn.sigmoid(gl)
    return (g * h + (1.0 - g) * x2).reshape(B, S, D)


if __name__ == "__main__":
    # Small shapes consistent with SDENModel(feature_dim).forward on (B, S, D).
    B, S, D = 2, 128, 128          # M = 256 -> 2 parallel 128-row tiles
    H = 2 * D
    TEMPERATURE = 0.1

    key = jax.random.PRNGKey(0)
    kx, kp = jax.random.split(key)
    x = jax.random.normal(kx, (B, S, D), jnp.float32)
    params = init_params(kp, D, H)
    prepared = prepare_params(params, TEMPERATURE)

    out = dual_emergence_optimizer(x, prepared)
    out = jax.block_until_ready(out)

    ref = reference_forward(x, params, TEMPERATURE)
    assert out.shape == (B, S, D)
    assert jnp.allclose(out, ref, atol=2e-3, rtol=2e-3), float(
        jnp.max(jnp.abs(out - ref)))

    print("KERNEL_OK")
</pallas_src>

<mosaic_0001>
module attributes {stable_mosaic.version = 11 : i64} {
  func.func @_dual_opt_kernel(%arg0: i32, %arg1: memref<128x128xf32, #tpu.memory_space<vmem>>, %arg2: memref<128x384xbf16, #tpu.memory_space<vmem>>, %arg3: memref<1x384xf32, #tpu.memory_space<vmem>>, %arg4: memref<256x128xbf16, #tpu.memory_space<vmem>>, %arg5: memref<1x128xf32, #tpu.memory_space<vmem>>, %arg6: memref<128x128xf32, #tpu.memory_space<vmem>>) attributes {dimension_semantics = [#tpu.dimension_semantics<parallel>], iteration_bounds = array<i64: 2>, scalar_prefetch = 0 : i64, scratch_operands = 0 : i64, tpu.core_type = #tpu.core_type<tc>, window_params = [{transform_indices = @transform_0, window_bounds = array<i64: 128, 128>}, {pipeline_mode = #tpu.pipeline_mode<synchronous>, transform_indices = @transform_1, window_bounds = array<i64: 128, 384>}, {pipeline_mode = #tpu.pipeline_mode<synchronous>, transform_indices = @transform_2, window_bounds = array<i64: 1, 384>}, {pipeline_mode = #tpu.pipeline_mode<synchronous>, transform_indices = @transform_3, window_bounds = array<i64: 256, 128>}, {pipeline_mode = #tpu.pipeline_mode<synchronous>, transform_indices = @transform_4, window_bounds = array<i64: 1, 128>}, {transform_indices = @transform_5, window_bounds = array<i64: 128, 128>}]} {
    %c0 = arith.constant 0 : index
    %c0_0 = arith.constant 0 : index
    %0 = vector.load %arg1[%c0, %c0_0] : memref<128x128xf32, #tpu.memory_space<vmem>>, vector<128x128xf32>
    %1 = arith.truncf %0 : vector<128x128xf32> to vector<128x128xbf16>
    %c0_1 = arith.constant 0 : index
    %c0_2 = arith.constant 0 : index
    %2 = vector.load %arg2[%c0_1, %c0_2] : memref<128x384xbf16, #tpu.memory_space<vmem>>, vector<128x384xbf16>
    %cst = arith.constant dense<0.000000e+00> : vector<128x384xf32>
    %3 = tpu.matmul %1, %2, %cst {dimension_numbers = #tpu.dot_dimension_numbers<[1], [0], [0], [1], [0, 0, 1, 1], [], []>} : vector<128x128xbf16>, vector<128x384xbf16>, vector<128x384xf32> -> vector<128x384xf32>
    %c0_3 = arith.constant 0 : index
    %c0_4 = arith.constant 0 : index
    %4 = vector.load %arg3[%c0_3, %c0_4] : memref<1x384xf32, #tpu.memory_space<vmem>>, vector<1x384xf32>
    %5 = vector.broadcast %4 : vector<1x384xf32> to vector<128x384xf32>
    %6 = arith.addf %3, %5 : vector<128x384xf32>
    %7 = vector.extract_strided_slice %6 {offsets = [0, 0], sizes = [128, 256], strides = [1, 1]} : vector<128x384xf32> to vector<128x256xf32>
    %8 = arith.mulf %7, %7 : vector<128x256xf32>
    %9 = arith.mulf %7, %8 : vector<128x256xf32>
    %cst_5 = arith.constant 4.471500e-02 : f32
    %10 = vector.broadcast %cst_5 : f32 to vector<128x256xf32>
    %11 = arith.mulf %10, %9 : vector<128x256xf32>
    %12 = arith.addf %7, %11 : vector<128x256xf32>
    %cst_6 = arith.constant 0.797884583 : f32
    %13 = vector.broadcast %cst_6 : f32 to vector<128x256xf32>
    %14 = arith.mulf %13, %12 : vector<128x256xf32>
    %15 = math.tanh %14 : vector<128x256xf32>
    %cst_7 = arith.constant 1.000000e+00 : f32
    %16 = vector.broadcast %cst_7 : f32 to vector<128x256xf32>
    %17 = arith.addf %16, %15 : vector<128x256xf32>
    %cst_8 = arith.constant 5.000000e-01 : f32
    %18 = vector.broadcast %cst_8 : f32 to vector<128x256xf32>
    %19 = arith.mulf %18, %17 : vector<128x256xf32>
    %20 = arith.mulf %7, %19 : vector<128x256xf32>
    %21 = vector.extract_strided_slice %6 {offsets = [0, 256], sizes = [128, 128], strides = [1, 1]} : vector<128x384xf32> to vector<128x128xf32>
    %22 = arith.negf %21 : vector<128x128xf32>
    %23 = math.exp %22 : vector<128x128xf32>
    %cst_9 = arith.constant 1.000000e+00 : f32
    %24 = vector.broadcast %cst_9 : f32 to vector<128x128xf32>
    %25 = arith.addf %24, %23 : vector<128x128xf32>
    %26 = arith.divf %24, %25 : vector<128x128xf32>
    %27 = arith.truncf %20 : vector<128x256xf32> to vector<128x256xbf16>
    %c0_10 = arith.constant 0 : index
    %c0_11 = arith.constant 0 : index
    %28 = vector.load %arg4[%c0_10, %c0_11] : memref<256x128xbf16, #tpu.memory_space<vmem>>, vector<256x128xbf16>
    %cst_12 = arith.constant dense<0.000000e+00> : vector<128x128xf32>
    %29 = tpu.matmul %27, %28, %cst_12 {dimension_numbers = #tpu.dot_dimension_numbers<[1], [0], [0], [1], [0, 0, 1, 1], [], []>} : vector<128x256xbf16>, vector<256x128xbf16>, vector<128x128xf32> -> vector<128x128xf32>
    %c0_13 = arith.constant 0 : index
    %c0_14 = arith.constant 0 : index
    %30 = vector.load %arg5[%c0_13, %c0_14] : memref<1x128xf32, #tpu.memory_space<vmem>>, vector<1x128xf32>
    %31 = vector.broadcast %30 : vector<1x128xf32> to vector<128x128xf32>
    %32 = arith.addf %29, %31 : vector<128x128xf32>
    %33 = arith.subf %32, %0 : vector<128x128xf32>
    %34 = arith.mulf %26, %33 : vector<128x128xf32>
    %35 = arith.addf %0, %34 : vector<128x128xf32>
    %c0_15 = arith.constant 0 : index
    %c0_16 = arith.constant 0 : index
    %36 = vector.load %arg6[%c0_15, %c0_16] : memref<128x128xf32, #tpu.memory_space<vmem>>, vector<128x128xf32>
    tpu.vector_store %arg6[%c0_15, %c0_16], %35 {strides = array<i32>} : memref<128x128xf32, #tpu.memory_space<vmem>>, vector<128x128xf32>,
    return
  }
  func.func @transform_0(%arg0: i32) -> (i32, i32) {
    %c0_i32 = arith.constant 0 : i32
    %c0_i32_0 = arith.constant 0 : i32
    return %arg0, %c0_i32 : i32, i32
  }
  func.func @transform_1(%arg0: i32) -> (i32, i32) {
    %c0_i32 = arith.constant 0 : i32
    %c0_i32_0 = arith.constant 0 : i32
    %c0_i32_1 = arith.constant 0 : i32
    return %c0_i32, %c0_i32_0 : i32, i32
  }
  func.func @transform_2(%arg0: i32) -> (i32, i32) {
    %c0_i32 = arith.constant 0 : i32
    %c0_i32_0 = arith.constant 0 : i32
    %c0_i32_1 = arith.constant 0 : i32
    return %c0_i32, %c0_i32_0 : i32, i32
  }
  func.func @transform_3(%arg0: i32) -> (i32, i32) {
    %c0_i32 = arith.constant 0 : i32
    %c0_i32_0 = arith.constant 0 : i32
    %c0_i32_1 = arith.constant 0 : i32
    return %c0_i32, %c0_i32_0 : i32, i32
  }
  func.func @transform_4(%arg0: i32) -> (i32, i32) {
    %c0_i32 = arith.constant 0 : i32
    %c0_i32_0 = arith.constant 0 : i32
    %c0_i32_1 = arith.constant 0 : i32
    return %c0_i32, %c0_i32_0 : i32, i32
  }
  func.func @transform_5(%arg0: i32) -> (i32, i32) {
    %c0_i32 = arith.constant 0 : i32
    %c0_i32_0 = arith.constant 0 : i32
    return %arg0, %c0_i32 : i32, i32
  }
}

</mosaic_0001>

<llo_original>
// kernel: tpu_custom_call.1
$region0: #{tpu_custom_call.1}
  #allocation0 [shape = 'u32[]', space=smem, size = 0x4, offset = 0x4, fixed_abs, tag = 'smem constant byte address 0x4 - core index']
  #allocation1 [shape = 'u32[144,128]{1,0:T(1,128)}', space=vmem, size = 0x12000, scoped, tag = 'internal scratch']
  %s0 = inlined_call_operand.hbm [shape: f32[256,128], index: 0, kind: input, shape index: {}]
  %s1 = inlined_call_operand.hbm [shape: bf16[128,384], index: 1, kind: input, shape index: {}]
  %s2 = inlined_call_operand.vmem [shape: f32[1,384], index: 2, kind: input, shape index: {}]
  %s3 = inlined_call_operand.hbm [shape: bf16[256,128], index: 3, kind: input, shape index: {}]
  %s4 = inlined_call_operand.vmem [shape: f32[1,128], index: 4, kind: input, shape index: {}]
  %s5 = inlined_call_operand.hbm [shape: f32[256,128], index: 5, kind: output, shape index: {}]
  %s6 = sld [smem:[#allocation0]]
  $region65: #{tpu_custom_call.1} parent=0
    _
  %s8 = ssub.s32 1, %s6
  %s9 = scalar_select 0, %s8, %s6
  $region1: #{tpu_custom_call.1} parent=0
    #allocation2 [shape = 'u8[131072]{0}', space=vmem, size = 0x20000, scoped, tag = 'input window, operand 0']
    #allocation3 [shape = 's32[2]{0}', space=sflag, size = 0x8, scoped, tag = 'scoped memory for tpu_custom_call.1']
    #allocation4 [shape = 's32[2]{0}', space=sflag, size = 0x8, scoped, tag = 'scoped memory for tpu_custom_call.1']
    #allocation5 [shape = 'u8[98304]{0}', space=vmem, size = 0x18000, scoped, tag = 'input window, operand 1, single buffered']
    #allocation6 [shape = 's32[1]{0}', space=sflag, size = 0x4, scoped, tag = 'scoped memory for tpu_custom_call.1']
    #allocation7 [shape = 'u8[65536]{0}', space=vmem, size = 0x10000, scoped, tag = 'input window, operand 3, single buffered']
    #allocation8 [shape = 'u8[131072]{0}', space=vmem, size = 0x20000, scoped, tag = 'output window, operand 0']
    %10 = vsyncpa [#allocation3], 0
    %s11 = scalar_lea.sflag [#allocation3], 1
    %12 = vsyncpa %s11, 0
    %13 = vsyncpa [#allocation6], 0
    %14 = vsyncpa [#allocation4], 0
    %s15 = scalar_lea.sflag [#allocation4], 1
    %16 = vsyncpa %s15, 0
    loop: start=0, step=1, limit=4
    $region2: #{tpu_custom_call.1} parent=1 // loop_pre_header
      _
    $region3: #{tpu_custom_call.1} parent=1 // loop_header
      %s18 = sphi 0, %s22
      %p19 = scmp.ge.s32.totalorder %s18, 4
      %s28 = sphi 0, %s30
      %s31 = sphi 0, %s28
      %s32 = sphi 0, %s31
      %s48 = sphi 0, %s32
      %s52 = sphi 0, %s52
      %s54 = sphi 0, %s52
      %s55 = sphi 0, %s54
      %s69 = sphi 0, %s55
      %s73 = sphi 0, %s73
      %s75 = sphi 0, %s73
      %s76 = sphi 0, %s75
      %s90 = sphi 0, %s76
      %s94 = sphi 0, %s94
      %s96 = sphi 0, %s94
      %s97 = sphi 0, %s96
      %s111 = sphi 0, %s97
      %s115 = sphi 0, %s115
      %s117 = sphi 0, %s115
      %s118 = sphi 0, %s117
      %s132 = sphi 0, %s118
      %s138 = sphi 0, %s140
      %s141 = sphi 0, %s138
      %s142 = sphi 0, %s141
      %s158 = sphi 0, %s142
    $region4: #{tpu_custom_call.1} parent=1 // loop_header_branch
      %21 = sbr.rel (%p19) target = $region8
    $region5: #{tpu_custom_call.1} parent=1 // loop_body
      %s23 = ssub.s32 %s18, 1
      %s24 = ssub.s32 %s18, 2
      %s25 = sadd.s32 %s18, 1
      %s26 = ssub.s32 %s18, %s25
      %p27 = scmp.eq.s32.totalorder %s26, 0
      %s29 = sadd.s32 %s28, 1
      %s30 = scalar_select %p27, %s28, %s29
      %p33 = pneg %p27
      %p34 = scmp.eq.s32.totalorder %s18, 1
      %p35 = por %p33, %p34
      %p36 = scmp.ne.s32.totalorder %s28, %s31
      %p37 = scmp.eq.s32.totalorder %s18, 0
      %p38 = por %p36, %p37
      %p39 = scmp.ne.s32.totalorder %s28, %s31
      %p40 = scmp.eq.s32.totalorder %s23, 1
      %p41 = por %p39, %p40
      %p42 = scmp.ne.s32.totalorder %s31, %s32
      %p43 = scmp.eq.s32.totalorder %s23, 0
      %p44 = por %p42, %p43
      %p45 = scmp.ne.s32.totalorder %s31, %s32
      %p46 = scmp.eq.s32.totalorder %s24, 1
      %p47 = por %p45, %p46
      %p49 = scmp.ne.s32.totalorder %s32, %s48
      %p50 = scmp.eq.s32.totalorder %s24, 0
      %p51 = por %p49, %p50
      %s53 = sadd.s32 %s52, 1
      %p56 = scmp.eq.s32.totalorder %s18, 1
      %p57 = scmp.ne.s32.totalorder %s52, %s54
      %p58 = scmp.eq.s32.totalorder %s18, 0
      %p59 = por %p57, %p58
      %p60 = scmp.ne.s32.totalorder %s52, %s54
      %p61 = scmp.eq.s32.totalorder %s23, 1
      %p62 = por %p60, %p61
      %p63 = scmp.ne.s32.totalorder %s54, %s55
      %p64 = scmp.eq.s32.totalorder %s23, 0
      %p65 = por %p63, %p64
      %p66 = scmp.ne.s32.totalorder %s54, %s55
      %p67 = scmp.eq.s32.totalorder %s24, 1
      %p68 = por %p66, %p67
      %p70 = scmp.ne.s32.totalorder %s55, %s69
      %p71 = scmp.eq.s32.totalorder %s24, 0
      %p72 = por %p70, %p71
      %s74 = sadd.s32 %s73, 1
      %p77 = scmp.eq.s32.totalorder %s18, 1
      %p78 = scmp.ne.s32.totalorder %s73, %s75
      %p79 = scmp.eq.s32.totalorder %s18, 0
      %p80 = por %p78, %p79
      %p81 = scmp.ne.s32.totalorder %s73, %s75
      %p82 = scmp.eq.s32.totalorder %s23, 1
      %p83 = por %p81, %p82
      %p84 = scmp.ne.s32.totalorder %s75, %s76
      %p85 = scmp.eq.s32.totalorder %s23, 0
      %p86 = por %p84, %p85
      %p87 = scmp.ne.s32.totalorder %s75, %s76
      %p88 = scmp.eq.s32.totalorder %s24, 1
      %p89 = por %p87, %p88
      %p91 = scmp.ne.s32.totalorder %s76, %s90
      %p92 = scmp.eq.s32.totalorder %s24, 0
      %p93 = por %p91, %p92
      %s95 = sadd.s32 %s94, 1
      %p98 = scmp.eq.s32.totalorder %s18, 1
      %p99 = scmp.ne.s32.totalorder %s94, %s96
      %p100 = scmp.eq.s32.totalorder %s18, 0
      %p101 = por %p99, %p100
      %p102 = scmp.ne.s32.totalorder %s94, %s96
      %p103 = scmp.eq.s32.totalorder %s23, 1
      %p104 = por %p102, %p103
      %p105 = scmp.ne.s32.totalorder %s96, %s97
      %p106 = scmp.eq.s32.totalorder %s23, 0
      %p107 = por %p105, %p106
      %p108 = scmp.ne.s32.totalorder %s96, %s97
      %p109 = scmp.eq.s32.totalorder %s24, 1
      %p110 = por %p108, %p109
      %p112 = scmp.ne.s32.totalorder %s97, %s111
      %p113 = scmp.eq.s32.totalorder %s24, 0
      %p114 = por %p112, %p113
      %s116 = sadd.s32 %s115, 1
      %p119 = scmp.eq.s32.totalorder %s18, 1
      %p120 = scmp.ne.s32.totalorder %s115, %s117
      %p121 = scmp.eq.s32.totalorder %s18, 0
      %p122 = por %p120, %p121
      %p123 = scmp.ne.s32.totalorder %s115, %s117
      %p124 = scmp.eq.s32.totalorder %s23, 1
      %p125 = por %p123, %p124
      %p126 = scmp.ne.s32.totalorder %s117, %s118
      %p127 = scmp.eq.s32.totalorder %s23, 0
      %p128 = por %p126, %p127
      %p129 = scmp.ne.s32.totalorder %s117, %s118
      %p130 = scmp.eq.s32.totalorder %s24, 1
      %p131 = por %p129, %p130
      %p133 = scmp.ne.s32.totalorder %s118, %s132
      %p134 = scmp.eq.s32.totalorder %s24, 0
      %p135 = por %p133, %p134
      %s136 = ssub.s32 %s18, %s25
      %p137 = scmp.eq.s32.totalorder %s136, 0
      %s139 = sadd.s32 %s138, 1
      %s140 = scalar_select %p137, %s138, %s139
      %p143 = pneg %p137
      %p144 = scmp.eq.s32.totalorder %s18, 1
      %p145 = por %p143, %p144
      %p146 = scmp.ne.s32.totalorder %s138, %s141
      %p147 = scmp.eq.s32.totalorder %s18, 0
      %p148 = por %p146, %p147
      %p149 = scmp.ne.s32.totalorder %s138, %s141
      %p150 = scmp.eq.s32.totalorder %s23, 1
      %p151 = por %p149, %p150
      %p152 = scmp.ne.s32.totalorder %s141, %s142
      %p153 = scmp.eq.s32.totalorder %s23, 0
      %p154 = por %p152, %p153
      %p155 = scmp.ne.s32.totalorder %s141, %s142
      %p156 = scmp.eq.s32.totalorder %s24, 1
      %p157 = por %p155, %p156
      %p159 = scmp.ne.s32.totalorder %s142, %s158
      %p160 = scmp.eq.s32.totalorder %s24, 0
      %p161 = por %p159, %p160
      %p162 = scmp.le.s32.totalorder 1, %s18
      %p163 = scmp.lt.s32.totalorder %s18, 3
      %p164 = pnand %p162, %p163
      %p165 = pneg %p164
      // Predicated region
      $region9: #{tpu_custom_call.1} parent=5 // pred_check
        _
      $region10: #{tpu_custom_call.1} parent=5 // pred_check_branch
        %167 = sbr.rel (%p164) target = $region12
      $region11: #{tpu_custom_call.1} parent=5 // pred_region
        %s168 = ssub.s32 %s18, 1
        // Predicated region
        $region13: #{tpu_custom_call.1} parent=11 // pred_check
          %p169 = pneg %p65
        $region14: #{tpu_custom_call.1} parent=11 // pred_check_branch
          %171 = sbr.rel (%p169) target = $region16
        $region15: #{tpu_custom_call.1} parent=11 // pred_region
          %s173 = ssub.s32 3072, 3072
          %174 = vsyncadd [#allocation6], %s173
          %s175 = sshll.u32 [#allocation5], 4
          %s176 = int_to_ptr.vmem [resolvable:$true] %s175
          %181 = dma.hbm_to_vmem [thread:$0]  %s1, 3072, %s176, [#allocation6], 192, 192, 12
        $region16: #{tpu_custom_call.1} parent=11 // pred_fallthru
          _
        // Predicated region
        $region17: #{tpu_custom_call.1} parent=11 // pred_check
          %p182 = pneg %p86
        $region18: #{tpu_custom_call.1} parent=11 // pred_check_branch
          %184 = sbr.rel (%p182) target = $region20
        $region19: #{tpu_custom_call.1} parent=11 // pred_region
          _
        $region20: #{tpu_custom_call.1} parent=11 // pred_fallthru
          _
        // Predicated region
        $region21: #{tpu_custom_call.1} parent=11 // pred_check
          %p185 = pneg %p107
        $region22: #{tpu_custom_call.1} parent=11 // pred_check_branch
          %187 = sbr.rel (%p185) target = $region24
        $region23: #{tpu_custom_call.1} parent=11 // pred_region
          %s189 = ssub.s32 2048, 2048
          %190 = vsyncadd [#allocation6], %s189
          %s191 = sshll.u32 [#allocation7], 4
          %s192 = int_to_ptr.vmem [resolvable:$true] %s191
          %197 = dma.hbm_to_vmem [thread:$0]  %s3, 2048, %s192, [#allocation6], 64, 64, 4
        $region24: #{tpu_custom_call.1} parent=11 // pred_fallthru
          _
        // Predicated region
        $region25: #{tpu_custom_call.1} parent=11 // pred_check
          %p198 = pneg %p128
        $region26: #{tpu_custom_call.1} parent=11 // pred_check_branch
          %200 = sbr.rel (%p198) target = $region28
        $region27: #{tpu_custom_call.1} parent=11 // pred_region
          _
        $region28: #{tpu_custom_call.1} parent=11 // pred_fallthru
          _
      $region12: #{tpu_custom_call.1} parent=5 // pred_fallthru
        _
      %p201 = scmp.lt.s32.totalorder %s18, 2
      // Predicated region
      $region29: #{tpu_custom_call.1} parent=5 // pred_check
        %p202 = pneg %p201
      $region30: #{tpu_custom_call.1} parent=5 // pred_check_branch
        %204 = sbr.rel (%p202) target = $region32
      $region31: #{tpu_custom_call.1} parent=5 // pred_region
        // Predicated region
        $region33: #{tpu_custom_call.1} parent=31 // pred_check
          %p205 = pneg %p38
        $region34: #{tpu_custom_call.1} parent=31 // pred_check_branch
          %207 = sbr.rel (%p205) target = $region36
        $region35: #{tpu_custom_call.1} parent=31 // pred_region
          %s208 = sand.u32 %s28, 1
          %s209 = scalar_lea.sflag [#allocation3], %s208
          %s210 = sand.u32 %s28, 1
          %s211 = smul.addr %s210, 128
          %s212 = scalar_lea.vmem [#allocation2], %s211
          %s213 = smul.u32 16, %s18
          %s215 = ssub.s32 2048, 2048
          %216 = vsyncadd %s209, %s215
          %s217 = smul.addr %s213, 128
          %s218 = scalar_lea.hbm %s0, %s217
          %s219 = sshll.u32 %s212, 4
          %s220 = int_to_ptr.vmem [resolvable:$true] %s219
          %225 = dma.hbm_to_vmem [thread:$0]  %s218, 2048, %s220, %s209, 128, 128, 8
        $region36: #{tpu_custom_call.1} parent=31 // pred_fallthru
          _
      $region32: #{tpu_custom_call.1} parent=5 // pred_fallthru
        _
      %p226 = scmp.le.s32.totalorder 1, %s18
      %p227 = scmp.lt.s32.totalorder %s18, 3
      %p228 = pnand %p226, %p227
      %p229 = pneg %p228
      // Predicated region
      $region37: #{tpu_custom_call.1} parent=5 // pred_check
        _
      $region38: #{tpu_custom_call.1} parent=5 // pred_check_branch
        %231 = sbr.rel (%p228) target = $region40
      $region39: #{tpu_custom_call.1} parent=5 // pred_region
        %s232 = ssub.s32 %s18, 1
        %s233 = sand.u32 %s31, 1
        %s234 = scalar_lea.sflag [#allocation3], %s233
        %s235 = sand.u32 %s31, 1
        %s236 = smul.addr %s235, 128
        %s237 = scalar_lea.vmem [#allocation2], %s236
        // Predicated region
        $region41: #{tpu_custom_call.1} parent=39 // pred_check
          %p238 = pneg %p44
        $region42: #{tpu_custom_call.1} parent=39 // pred_check_branch
          %240 = sbr.rel (%p238) target = $region44
        $region43: #{tpu_custom_call.1} parent=39 // pred_region
          %241 = dma.done %s234, 2048
        $region44: #{tpu_custom_call.1} parent=39 // pred_fallthru
          _
        // Predicated region
        $region45: #{tpu_custom_call.1} parent=39 // pred_check
          %p242 = pneg %p65
        $region46: #{tpu_custom_call.1} parent=39 // pred_check_branch
          %244 = sbr.rel (%p242) target = $region48
        $region47: #{tpu_custom_call.1} parent=39 // pred_region
          %245 = dma.done [#allocation6], 3072
        $region48: #{tpu_custom_call.1} parent=39 // pred_fallthru
          _
        // Predicated region
        $region49: #{tpu_custom_call.1} parent=39 // pred_check
          %p246 = pneg %p107
        $region50: #{tpu_custom_call.1} parent=39 // pred_check_branch
          %248 = sbr.rel (%p246) target = $region52
        $region51: #{tpu_custom_call.1} parent=39 // pred_region
          %249 = dma.done [#allocation6], 2048
        $region52: #{tpu_custom_call.1} parent=39 // pred_fallthru
          _
        %s250 = sand.u32 %s31, 1
        %s251 = scalar_lea.sflag [#allocation3], %s250
        %s252 = sand.u32 %s31, 1
        %s253 = smul.addr %s252, 128
        %s254 = scalar_lea.vmem [#allocation2], %s253
        %p255 = pneg %p44
        %p256 = pneg %p41
        %p257 = pneg %p65
        %p258 = pneg %p62
        %p259 = pneg %p86
        %p260 = pneg %p83
        %p261 = pneg %p107
        %p262 = pneg %p104
        %p263 = pneg %p128
        %p264 = pneg %p125
        %p265 = pneg %p154
        %p266 = pneg %p151
        %s267 = sand.u32 %s141, 1
        %s268 = scalar_lea.sflag [#allocation4], %s267
        %s269 = sand.u32 %s141, 1
        %s270 = smul.addr %s269, 128
        %s271 = scalar_lea.vmem [#allocation8], %s270
        %s272 = smul.u32 16, %s23
        %s273 = smul.u32 16, %s23
        %v275 = vld [vmem:[%s237] sm:$0xff]
        %v276 = vld [vmem:[%s237 + $0x8] sm:$0xff]
        %v277 = vld [vmem:[%s237 + $0x10] sm:$0xff]
        %v278 = vld [vmem:[%s237 + $0x18] sm:$0xff]
        %v279 = vld [vmem:[%s237 + $0x20] sm:$0xff]
        %v280 = vld [vmem:[%s237 + $0x28] sm:$0xff]
        %v281 = vld [vmem:[%s237 + $0x30] sm:$0xff]
        %v282 = vld [vmem:[%s237 + $0x38] sm:$0xff]
        %v283 = vld [vmem:[%s237 + $0x40] sm:$0xff]
        %v284 = vld [vmem:[%s237 + $0x48] sm:$0xff]
        %v285 = vld [vmem:[%s237 + $0x50] sm:$0xff]
        %v286 = vld [vmem:[%s237 + $0x58] sm:$0xff]
        %v287 = vld [vmem:[%s237 + $0x60] sm:$0xff]
        %v288 = vld [vmem:[%s237 + $0x68] sm:$0xff]
        %v289 = vld [vmem:[%s237 + $0x70] sm:$0xff]
        %v290 = vld [vmem:[%s237 + $0x78] sm:$0xff]
        %v291 = vpack.c.bf16 %v276, %v275
        %v292 = vpack.c.bf16 %v278, %v277
        %v293 = vpack.c.bf16 %v280, %v279
        %v294 = vpack.c.bf16 %v282, %v281
        %v295 = vpack.c.bf16 %v284, %v283
        %v296 = vpack.c.bf16 %v286, %v285
        %v297 = vpack.c.bf16 %v288, %v287
        %v298 = vpack.c.bf16 %v290, %v289
        %v299 = vld [vmem:[#allocation5] sm:$0xff]
        %v300 = vld [vmem:[#allocation5 + $0x8] sm:$0xf]
        %v301 = vld [vmem:[#allocation5 + $0xc] sm:$0xff]
        %v302 = vld [vmem:[#allocation5 + $0x14] sm:$0xf]
        %v303 = vld [vmem:[#allocation5 + $0x18] sm:$0xff]
        %v304 = vld [vmem:[#allocation5 + $0x20] sm:$0xf]
        %v305 = vld [vmem:[#allocation5 + $0x24] sm:$0xff]
        %v306 = vld [vmem:[#allocation5 + $0x2c] sm:$0xf]
        %v307 = vld [vmem:[#allocation5 + $0x30] sm:$0xff]
        %v308 = vld [vmem:[#allocation5 + $0x38] sm:$0xf]
        %v309 = vld [vmem:[#allocation5 + $0x3c] sm:$0xff]
        %v310 = vld [vmem:[#allocation5 + $0x44] sm:$0xf]
        %v311 = vld [vmem:[#allocation5 + $0x48] sm:$0xff]
        %v312 = vld [vmem:[#allocation5 + $0x50] sm:$0xf]
        %v313 = vld [vmem:[#allocation5 + $0x54] sm:$0xff]
        %v314 = vld [vmem:[#allocation5 + $0x5c] sm:$0xf]
        %v315 = vld [vmem:[#allocation5 + $0x60] sm:$0xff]
        %v316 = vld [vmem:[#allocation5 + $0x68] sm:$0xf]
        %v317 = vld [vmem:[#allocation5 + $0x6c] sm:$0xff]
        %v318 = vld [vmem:[#allocation5 + $0x74] sm:$0xf]
        %v319 = vld [vmem:[#allocation5 + $0x78] sm:$0xff]
        %v320 = vld [vmem:[#allocation5 + $0x80] sm:$0xf]
        %v321 = vld [vmem:[#allocation5 + $0x84] sm:$0xff]
        %v322 = vld [vmem:[#allocation5 + $0x8c] sm:$0xf]
        %v323 = vld [vmem:[#allocation5 + $0x90] sm:$0xff]
        %v324 = vld [vmem:[#allocation5 + $0x98] sm:$0xf]
        %v325 = vld [vmem:[#allocation5 + $0x9c] sm:$0xff]
        %v326 = vld [vmem:[#allocation5 + $0xa4] sm:$0xf]
        %v327 = vld [vmem:[#allocation5 + $0xa8] sm:$0xff]
        %v328 = vld [vmem:[#allocation5 + $0xb0] sm:$0xf]
        %v329 = vld [vmem:[#allocation5 + $0xb4] sm:$0xff]
        %v330 = vld [vmem:[#allocation5 + $0xbc] sm:$0xf]
        %v331 = vld [vmem:[%s2] sm:$0x7]
        %v333 = vlaneseq
        %v334 = vshrl.u32 %v333, 7
        %v335 = vsub.s32 0, %v334
        %v336 = vrot.slane %v331, %v335
        %v337 = vlaneseq
        %v338 = vshrl.u32 %v337, 7
        %v339 = vsub.s32 1, %v338
        %v340 = vrot.slane %v331, %v339
        %v341 = vlaneseq
        %v342 = vshrl.u32 %v341, 7
        %v343 = vsub.s32 2, %v342
        %v344 = vrot.slane %v331, %v343
        %v380 = vunpack.c.l.b16 %v299
        %v381 = vunpack.c.h.b16 %v299
        %v382 = vunpack.c.l.b16 %v300
        %v383 = vunpack.c.l.b16 %v301
        %v384 = vunpack.c.h.b16 %v301
        %v385 = vunpack.c.l.b16 %v302
        %v386 = vunpack.c.l.b16 %v303
        %v387 = vunpack.c.h.b16 %v303
        %v388 = vunpack.c.l.b16 %v304
        %v389 = vunpack.c.l.b16 %v305
        %v390 = vunpack.c.h.b16 %v305
        %v391 = vunpack.c.l.b16 %v306
        %v392 = vunpack.c.l.b16 %v307
        %v393 = vunpack.c.h.b16 %v307
        %v394 = vunpack.c.l.b16 %v308
        %v395 = vunpack.c.l.b16 %v309
        %v396 = vunpack.c.h.b16 %v309
        %v397 = vunpack.c.l.b16 %v310
        %v398 = vunpack.c.l.b16 %v311
        %v399 = vunpack.c.h.b16 %v311
        %v400 = vunpack.c.l.b16 %v312
        %v401 = vunpack.c.l.b16 %v313
        %v402 = vunpack.c.h.b16 %v313
        %v403 = vunpack.c.l.b16 %v314
        %v404 = vunpack.c.l.b16 %v315
        %v405 = vunpack.c.h.b16 %v315
        %v406 = vunpack.c.l.b16 %v316
        %v407 = vunpack.c.l.b16 %v317
        %v408 = vunpack.c.h.b16 %v317
        %v409 = vunpack.c.l.b16 %v318
        %v410 = vunpack.c.l.b16 %v319
        %v411 = vunpack.c.h.b16 %v319
        %v412 = vunpack.c.l.b16 %v320
        %v413 = vunpack.c.l.b16 %v321
        %v414 = vunpack.c.h.b16 %v321
        %v415 = vunpack.c.l.b16 %v322
        %v416 = vunpack.c.l.b16 %v323
        %v417 = vunpack.c.h.b16 %v323
        %v418 = vunpack.c.l.b16 %v324
        %v419 = vunpack.c.l.b16 %v325
        %v420 = vunpack.c.h.b16 %v325
        %v421 = vunpack.c.l.b16 %v326
        %v422 = vunpack.c.l.b16 %v327
        %v423 = vunpack.c.h.b16 %v327
        %v424 = vunpack.c.l.b16 %v328
        %v425 = vunpack.c.l.b16 %v329
        %v426 = vunpack.c.h.b16 %v329
        %v427 = vunpack.c.l.b16 %v330
        %v428 = vpack.c.b16 %v383, %v380
        %v429 = vpack.c.b16 %v384, %v381
        %v430 = vpack.c.b16 %v385, %v382
        %v431 = vpack.c.b16 %v389, %v386
        %v432 = vpack.c.b16 %v390, %v387
        %v433 = vpack.c.b16 %v391, %v388
        %v434 = vpack.c.b16 %v395, %v392
        %v435 = vpack.c.b16 %v396, %v393
        %v436 = vpack.c.b16 %v397, %v394
        %v437 = vpack.c.b16 %v401, %v398
        %v438 = vpack.c.b16 %v402, %v399
        %v439 = vpack.c.b16 %v403, %v400
        %v440 = vpack.c.b16 %v407, %v404
        %v441 = vpack.c.b16 %v408, %v405
        %v442 = vpack.c.b16 %v409, %v406
        %v443 = vpack.c.b16 %v413, %v410
        %v444 = vpack.c.b16 %v414, %v411
        %v445 = vpack.c.b16 %v415, %v412
        %v446 = vpack.c.b16 %v419, %v416
        %v447 = vpack.c.b16 %v420, %v417
        %v448 = vpack.c.b16 %v421, %v418
        %v449 = vpack.c.b16 %v425, %v422
        %v450 = vpack.c.b16 %v426, %v423
        %v451 = vpack.c.b16 %v427, %v424
        %476 = vmatprep.subr.bf16.mxu0 %v429
        %477 = vmatpush1.bf16.msra.mxu0 %v428
        %478 = vmatprep.subr.bf16.mxu0 %v432
        %479 = vmatpush1.bf16.msra.mxu0 %v431
        %480 = vmatprep.subr.bf16.mxu0 %v435
        %481 = vmatpush1.bf16.msra.mxu0 %v434
        %482 = vmatprep.subr.bf16.mxu0 %v438
        %483 = vmatpush1.bf16.msra.mxu0 %v437
        %484 = vmatprep.subr.bf16.mxu0 %v441
        %485 = vmatpush1.bf16.msra.mxu0 %v440
        %486 = vmatprep.subr.bf16.mxu0 %v444
        %487 = vmatpush1.bf16.msra.mxu0 %v443
        %488 = vmatprep.subr.bf16.mxu0 %v447
        %489 = vmatpush1.bf16.msra.mxu0 %v446
        %490 = vmatprep.subr.bf16.mxu0 %v450
        %491 = vmatpush1.bf16.msra.mxu0 %v449
        %492 = vmatprep.subr.bf16.mxu0 0
        %493 = vmatpush1.bf16.msra.mxu0 0
        %494 = vmatprep.subr.bf16.mxu0 0
        %495 = vmatpush1.bf16.msra.mxu0 0
        %496 = vmatprep.subr.bf16.mxu0 0
        %497 = vmatpush1.bf16.msra.mxu0 0
        %498 = vmatprep.subr.bf16.mxu0 0
        %499 = vmatpush1.bf16.msra.mxu0 0
        %500 = vmatprep.subr.bf16.mxu0 0
        %501 = vmatpush1.bf16.msra.mxu0 0
        %502 = vmatprep.subr.bf16.mxu0 0
        %503 = vmatpush1.bf16.msra.mxu0 0
        %504 = vmatprep.subr.bf16.mxu0 0
        %505 = vmatpush1.bf16.msra.mxu0 0
        %506 = vmatprep.subr.bf16.mxu0 0
        %507 = vmatpush1.bf16.msra.mxu0 0
        %508 = vmatprep.mubr.bf16.mxu0 0
        %509 = vmatmul.mubr.bf16.gmra.mrb[0].mxu0 %v291
        %v510 = vpop.f32.mrb[0].mxu0
        %v511 = vadd.f32 %v336, %v510
        %v512 = vpop.f32.mrb[0].mxu0
        %v513 = vadd.f32 %v340, %v512
        %v514 = vpop.f32.mrb[0].mxu0
        %v515 = vadd.f32 %v336, %v514
        %v516 = vpop.f32.mrb[0].mxu0
        %v517 = vadd.f32 %v340, %v516
        %518 = vmatprep.mubr.bf16.mxu0 0
        %519 = vmatmul.mubr.bf16.gmra.mrb[0].mxu0 %v292
        %v520 = vpop.f32.mrb[0].mxu0
        %v521 = vadd.f32 %v336, %v520
        %v522 = vpop.f32.mrb[0].mxu0
        %v523 = vadd.f32 %v340, %v522
        %v524 = vpop.f32.mrb[0].mxu0
        %v525 = vadd.f32 %v336, %v524
        %v526 = vpop.f32.mrb[0].mxu0
        %v527 = vadd.f32 %v340, %v526
        %528 = vmatprep.mubr.bf16.mxu0 0
        %529 = vmatmul.mubr.bf16.gmra.mrb[0].mxu0 %v293
        %v530 = vpop.f32.mrb[0].mxu0
        %v531 = vadd.f32 %v336, %v530
        %v532 = vpop.f32.mrb[0].mxu0
        %v533 = vadd.f32 %v340, %v532
        %v534 = vpop.f32.mrb[0].mxu0
        %v535 = vadd.f32 %v336, %v534
        %v536 = vpop.f32.mrb[0].mxu0
        %v537 = vadd.f32 %v340, %v536
        %538 = vmatprep.mubr.bf16.mxu0 0
        %539 = vmatmul.mubr.bf16.gmra.mrb[0].mxu0 %v294
        %v540 = vpop.f32.mrb[0].mxu0
        %v541 = vadd.f32 %v336, %v540
        %v542 = vpop.f32.mrb[0].mxu0
        %v543 = vadd.f32 %v340, %v542
        %v544 = vpop.f32.mrb[0].mxu0
        %v545 = vadd.f32 %v336, %v544
        %v546 = vpop.f32.mrb[0].mxu0
        %v547 = vadd.f32 %v340, %v546
        %548 = vmatprep.mubr.bf16.mxu0 0
        %549 = vmatmul.mubr.bf16.gmra.mrb[0].mxu0 %v295
        %v550 = vpop.f32.mrb[0].mxu0
        %v551 = vadd.f32 %v336, %v550
        %v552 = vpop.f32.mrb[0].mxu0
        %v553 = vadd.f32 %v340, %v552
        %v554 = vpop.f32.mrb[0].mxu0
        %v555 = vadd.f32 %v336, %v554
        %v556 = vpop.f32.mrb[0].mxu0
        %v557 = vadd.f32 %v340, %v556
        %558 = vmatprep.mubr.bf16.mxu0 0
        %559 = vmatmul.mubr.bf16.gmra.mrb[0].mxu0 %v296
        %v560 = vpop.f32.mrb[0].mxu0
        %v561 = vadd.f32 %v336, %v560
        %v562 = vpop.f32.mrb[0].mxu0
        %v563 = vadd.f32 %v340, %v562
        %v564 = vpop.f32.mrb[0].mxu0
        %v565 = vadd.f32 %v336, %v564
        %v566 = vpop.f32.mrb[0].mxu0
        %v567 = vadd.f32 %v340, %v566
        %568 = vmatprep.mubr.bf16.mxu0 0
        %569 = vmatmul.mubr.bf16.gmra.mrb[0].mxu0 %v297
        %v570 = vpop.f32.mrb[0].mxu0
        %v571 = vadd.f32 %v336, %v570
        %v572 = vpop.f32.mrb[0].mxu0
        %v573 = vadd.f32 %v340, %v572
        %v574 = vpop.f32.mrb[0].mxu0
        %v575 = vadd.f32 %v336, %v574
        %v576 = vpop.f32.mrb[0].mxu0
        %v577 = vadd.f32 %v340, %v576
        %578 = vmatprep.mubr.bf16.mxu0 0
        %579 = vmatmul.mubr.bf16.gmra.mrb[0].mxu0 %v298
        %v580 = vpop.f32.mrb[0].mxu0
        %v581 = vadd.f32 %v336, %v580
        %v582 = vpop.f32.mrb[0].mxu0
        %v583 = vadd.f32 %v340, %v582
        %v584 = vpop.f32.mrb[0].mxu0
        %v585 = vadd.f32 %v336, %v584
        %v586 = vpop.f32.mrb[0].mxu0
        %v587 = vadd.f32 %v340, %v586
        %588 = vdwg.mxu0
        %589 = vmatprep.subr.bf16.mxu0 0
        %590 = vmatpush1.bf16.msra.mxu0 %v430
        %591 = vmatprep.subr.bf16.mxu0 0
        %592 = vmatpush1.bf16.msra.mxu0 %v433
        %593 = vmatprep.subr.bf16.mxu0 0
        %594 = vmatpush1.bf16.msra.mxu0 %v436
        %595 = vmatprep.subr.bf16.mxu0 0
        %596 = vmatpush1.bf16.msra.mxu0 %v439
        %597 = vmatprep.subr.bf16.mxu0 0
        %598 = vmatpush1.bf16.msra.mxu0 %v442
        %599 = vmatprep.subr.bf16.mxu0 0
        %600 = vmatpush1.bf16.msra.mxu0 %v445
        %601 = vmatprep.subr.bf16.mxu0 0
        %602 = vmatpush1.bf16.msra.mxu0 %v448
        %603 = vmatprep.subr.bf16.mxu0 0
        %604 = vmatpush1.bf16.msra.mxu0 %v451
        %605 = vmatprep.subr.bf16.mxu0 0
        %606 = vmatpush1.bf16.msra.mxu0 0
        %607 = vmatprep.subr.bf16.mxu0 0
        %608 = vmatpush1.bf16.msra.mxu0 0
        %609 = vmatprep.subr.bf16.mxu0 0
        %610 = vmatpush1.bf16.msra.mxu0 0
        %611 = vmatprep.subr.bf16.mxu0 0
        %612 = vmatpush1.bf16.msra.mxu0 0
        %613 = vmatprep.subr.bf16.mxu0 0
        %614 = vmatpush1.bf16.msra.mxu0 0
        %615 = vmatprep.subr.bf16.mxu0 0
        %616 = vmatpush1.bf16.msra.mxu0 0
        %617 = vmatprep.subr.bf16.mxu0 0
        %618 = vmatpush1.bf16.msra.mxu0 0
        %619 = vmatprep.subr.bf16.mxu0 0
        %620 = vmatpush1.bf16.msra.mxu0 0
        %621 = vmatprep.mubr.bf16.mxu0 0
        %622 = vmatmul.mubr.bf16.gmra.mrb[0].mxu0 %v291
        %v623 = vpop.f32.mrb[0].mxu0
        %v624 = vadd.f32 %v344, %v623
        %v625 = vpop.f32.mrb[0].mxu0
        %v626 = vpop.f32.mrb[0].mxu0
        %v627 = vadd.f32 %v344, %v626
        %v628 = vpop.f32.mrb[0].mxu0
        %629 = vmatprep.mubr.bf16.mxu0 0
        %630 = vmatmul.mubr.bf16.gmra.mrb[0].mxu0 %v292
        %v631 = vpop.f32.mrb[0].mxu0
        %v632 = vadd.f32 %v344, %v631
        %v633 = vpop.f32.mrb[0].mxu0
        %v634 = vpop.f32.mrb[0].mxu0
        %v635 = vadd.f32 %v344, %v634
        %v636 = vpop.f32.mrb[0].mxu0
        %637 = vmatprep.mubr.bf16.mxu0 0
        %638 = vmatmul.mubr.bf16.gmra.mrb[0].mxu0 %v293
        %v639 = vpop.f32.mrb[0].mxu0
        %v640 = vadd.f32 %v344, %v639
        %v641 = vpop.f32.mrb[0].mxu0
        %v642 = vpop.f32.mrb[0].mxu0
        %v643 = vadd.f32 %v344, %v642
        %v644 = vpop.f32.mrb[0].mxu0
        %645 = vmatprep.mubr.bf16.mxu0 0
        %646 = vmatmul.mubr.bf16.gmra.mrb[0].mxu0 %v294
        %v647 = vpop.f32.mrb[0].mxu0
        %v648 = vadd.f32 %v344, %v647
        %v649 = vpop.f32.mrb[0].mxu0
        %v650 = vpop.f32.mrb[0].mxu0
        %v651 = vadd.f32 %v344, %v650
        %v652 = vpop.f32.mrb[0].mxu0
        %653 = vmatprep.mubr.bf16.mxu0 0
        %654 = vmatmul.mubr.bf16.gmra.mrb[0].mxu0 %v295
        %v655 = vpop.f32.mrb[0].mxu0
        %v656 = vadd.f32 %v344, %v655
        %v657 = vpop.f32.mrb[0].mxu0
        %v658 = vpop.f32.mrb[0].mxu0
        %v659 = vadd.f32 %v344, %v658
        %v660 = vpop.f32.mrb[0].mxu0
        %661 = vmatprep.mubr.bf16.mxu0 0
        %662 = vmatmul.mubr.bf16.gmra.mrb[0].mxu0 %v296
        %v663 = vpop.f32.mrb[0].mxu0
        %v664 = vadd.f32 %v344, %v663
        %v665 = vpop.f32.mrb[0].mxu0
        %v666 = vpop.f32.mrb[0].mxu0
        %v667 = vadd.f32 %v344, %v666
        %v668 = vpop.f32.mrb[0].mxu0
        %669 = vmatprep.mubr.bf16.mxu0 0
        %670 = vmatmul.mubr.bf16.gmra.mrb[0].mxu0 %v297
        %v671 = vpop.f32.mrb[0].mxu0
        %v672 = vadd.f32 %v344, %v671
        %v673 = vpop.f32.mrb[0].mxu0
        %v674 = vpop.f32.mrb[0].mxu0
        %v675 = vadd.f32 %v344, %v674
        %v676 = vpop.f32.mrb[0].mxu0
        %677 = vmatprep.mubr.bf16.mxu0 0
        %678 = vmatmul.mubr.bf16.gmra.mrb[0].mxu0 %v298
        %v679 = vpop.f32.mrb[0].mxu0
        %v680 = vadd.f32 %v344, %v679
        %v681 = vpop.f32.mrb[0].mxu0
        %v682 = vpop.f32.mrb[0].mxu0
        %v683 = vadd.f32 %v344, %v682
        %v684 = vpop.f32.mrb[0].mxu0
        %685 = vdwg.mxu0
        %v686 = vmul.f32 %v511, %v511
        %v687 = vmul.f32 %v513, %v513
        %v688 = vmul.f32 %v515, %v515
        %v689 = vmul.f32 %v517, %v517
        %v690 = vmul.f32 %v521, %v521
        %v691 = vmul.f32 %v523, %v523
        %v692 = vmul.f32 %v525, %v525
        %v693 = vmul.f32 %v527, %v527
        %v694 = vmul.f32 %v531, %v531
        %v695 = vmul.f32 %v533, %v533
        %v696 = vmul.f32 %v535, %v535
        %v697 = vmul.f32 %v537, %v537
        %v698 = vmul.f32 %v541, %v541
        %v699 = vmul.f32 %v543, %v543
        %v700 = vmul.f32 %v545, %v545
        %v701 = vmul.f32 %v547, %v547
        %v702 = vmul.f32 %v551, %v551
        %v703 = vmul.f32 %v553, %v553
        %v704 = vmul.f32 %v555, %v555
        %v705 = vmul.f32 %v557, %v557
        %v706 = vmul.f32 %v561, %v561
        %v707 = vmul.f32 %v563, %v563
        %v708 = vmul.f32 %v565, %v565
        %v709 = vmul.f32 %v567, %v567
        %v710 = vmul.f32 %v571, %v571
        %v711 = vmul.f32 %v573, %v573
        %v712 = vmul.f32 %v575, %v575
        %v713 = vmul.f32 %v577, %v577
        %v714 = vmul.f32 %v581, %v581
        %v715 = vmul.f32 %v583, %v583
        %v716 = vmul.f32 %v585, %v585
        %v717 = vmul.f32 %v587, %v587
        %v718 = vmul.f32 %v511, %v686
        %v719 = vmul.f32 %v513, %v687
        %v720 = vmul.f32 %v515, %v688
        %v721 = vmul.f32 %v517, %v689
        %v722 = vmul.f32 %v521, %v690
        %v723 = vmul.f32 %v523, %v691
        %v724 = vmul.f32 %v525, %v692
        %v725 = vmul.f32 %v527, %v693
        %v726 = vmul.f32 %v531, %v694
        %v727 = vmul.f32 %v533, %v695
        %v728 = vmul.f32 %v535, %v696
        %v729 = vmul.f32 %v537, %v697
        %v730 = vmul.f32 %v541, %v698
        %v731 = vmul.f32 %v543, %v699
        %v732 = vmul.f32 %v545, %v700
        %v733 = vmul.f32 %v547, %v701
        %v734 = vmul.f32 %v551, %v702
        %v735 = vmul.f32 %v553, %v703
        %v736 = vmul.f32 %v555, %v704
        %v737 = vmul.f32 %v557, %v705
        %v738 = vmul.f32 %v561, %v706
        %v739 = vmul.f32 %v563, %v707
        %v740 = vmul.f32 %v565, %v708
        %v741 = vmul.f32 %v567, %v709
        %v742 = vmul.f32 %v571, %v710
        %v743 = vmul.f32 %v573, %v711
        %v744 = vmul.f32 %v575, %v712
        %v745 = vmul.f32 %v577, %v713
        %v746 = vmul.f32 %v581, %v714
        %v747 = vmul.f32 %v583, %v715
        %v748 = vmul.f32 %v585, %v716
        %v749 = vmul.f32 %v587, %v717
        %v750 = vmul.f32 %v718, 0.044715
        %v751 = vmul.f32 %v719, 0.044715
        %v752 = vmul.f32 %v720, 0.044715
        %v753 = vmul.f32 %v721, 0.044715
        %v754 = vmul.f32 %v722, 0.044715
        %v755 = vmul.f32 %v723, 0.044715
        %v756 = vmul.f32 %v724, 0.044715
        %v757 = vmul.f32 %v725, 0.044715
        %v758 = vmul.f32 %v726, 0.044715
        %v759 = vmul.f32 %v727, 0.044715
        %v760 = vmul.f32 %v728, 0.044715
        %v761 = vmul.f32 %v729, 0.044715
        %v762 = vmul.f32 %v730, 0.044715
        %v763 = vmul.f32 %v731, 0.044715
        %v764 = vmul.f32 %v732, 0.044715
        %v765 = vmul.f32 %v733, 0.044715
        %v766 = vmul.f32 %v734, 0.044715
        %v767 = vmul.f32 %v735, 0.044715
        %v768 = vmul.f32 %v736, 0.044715
        %v769 = vmul.f32 %v737, 0.044715
        %v770 = vmul.f32 %v738, 0.044715
        %v771 = vmul.f32 %v739, 0.044715
        %v772 = vmul.f32 %v740, 0.044715
        %v773 = vmul.f32 %v741, 0.044715
        %v774 = vmul.f32 %v742, 0.044715
        %v775 = vmul.f32 %v743, 0.044715
        %v776 = vmul.f32 %v744, 0.044715
        %v777 = vmul.f32 %v745, 0.044715
        %v778 = vmul.f32 %v746, 0.044715
        %v779 = vmul.f32 %v747, 0.044715
        %v780 = vmul.f32 %v748, 0.044715
        %v781 = vmul.f32 %v749, 0.044715
        %v782 = vadd.f32 %v511, %v750
        %v783 = vadd.f32 %v513, %v751
        %v784 = vadd.f32 %v515, %v752
        %v785 = vadd.f32 %v517, %v753
        %v786 = vadd.f32 %v521, %v754
        %v787 = vadd.f32 %v523, %v755
        %v788 = vadd.f32 %v525, %v756
        %v789 = vadd.f32 %v527, %v757
        %v790 = vadd.f32 %v531, %v758
        %v791 = vadd.f32 %v533, %v759
        %v792 = vadd.f32 %v535, %v760
        %v793 = vadd.f32 %v537, %v761
        %v794 = vadd.f32 %v541, %v762
        %v795 = vadd.f32 %v543, %v763
        %v796 = vadd.f32 %v545, %v764
        %v797 = vadd.f32 %v547, %v765
        %v798 = vadd.f32 %v551, %v766
        %v799 = vadd.f32 %v553, %v767
        %v800 = vadd.f32 %v555, %v768
        %v801 = vadd.f32 %v557, %v769
        %v802 = vadd.f32 %v561, %v770
        %v803 = vadd.f32 %v563, %v771
        %v804 = vadd.f32 %v565, %v772
        %v805 = vadd.f32 %v567, %v773
        %v806 = vadd.f32 %v571, %v774
        %v807 = vadd.f32 %v573, %v775
        %v808 = vadd.f32 %v575, %v776
        %v809 = vadd.f32 %v577, %v777
        %v810 = vadd.f32 %v581, %v778
        %v811 = vadd.f32 %v583, %v779
        %v812 = vadd.f32 %v585, %v780
        %v813 = vadd.f32 %v587, %v781
        %v814 = vmul.f32 %v782, 0.7978846
        %v815 = vmul.f32 %v783, 0.7978846
        %v816 = vmul.f32 %v784, 0.7978846
        %v817 = vmul.f32 %v785, 0.7978846
        %v818 = vmul.f32 %v786, 0.7978846
        %v819 = vmul.f32 %v787, 0.7978846
        %v820 = vmul.f32 %v788, 0.7978846
        %v821 = vmul.f32 %v789, 0.7978846
        %v822 = vmul.f32 %v790, 0.7978846
        %v823 = vmul.f32 %v791, 0.7978846
        %v824 = vmul.f32 %v792, 0.7978846
        %v825 = vmul.f32 %v793, 0.7978846
        %v826 = vmul.f32 %v794, 0.7978846
        %v827 = vmul.f32 %v795, 0.7978846
        %v828 = vmul.f32 %v796, 0.7978846
        %v829 = vmul.f32 %v797, 0.7978846
        %v830 = vmul.f32 %v798, 0.7978846
        %v831 = vmul.f32 %v799, 0.7978846
        %v832 = vmul.f32 %v800, 0.7978846
        %v833 = vmul.f32 %v801, 0.7978846
        %v834 = vmul.f32 %v802, 0.7978846
        %v835 = vmul.f32 %v803, 0.7978846
        %v836 = vmul.f32 %v804, 0.7978846
        %v837 = vmul.f32 %v805, 0.7978846
        %v838 = vmul.f32 %v806, 0.7978846
        %v839 = vmul.f32 %v807, 0.7978846
        %v840 = vmul.f32 %v808, 0.7978846
        %v841 = vmul.f32 %v809, 0.7978846
        %v842 = vmul.f32 %v810, 0.7978846
        %v843 = vmul.f32 %v811, 0.7978846
        %v844 = vmul.f32 %v812, 0.7978846
        %v845 = vmul.f32 %v813, 0.7978846
        %v846 = vtanh.pop %v814
        %v847 = vtanh.pop %v815
        %v848 = vtanh.pop %v816
        %v849 = vtanh.pop %v817
        %v850 = vtanh.pop %v818
        %v851 = vtanh.pop %v819
        %v852 = vtanh.pop %v820
        %v853 = vtanh.pop %v821
        %v854 = vtanh.pop %v822
        %v855 = vtanh.pop %v823
        %v856 = vtanh.pop %v824
        %v857 = vtanh.pop %v825
        %v858 = vtanh.pop %v826
        %v859 = vtanh.pop %v827
        %v860 = vtanh.pop %v828
        %v861 = vtanh.pop %v829
        %v862 = vtanh.pop %v830
        %v863 = vtanh.pop %v831
        %v864 = vtanh.pop %v832
        %v865 = vtanh.pop %v833
        %v866 = vtanh.pop %v834
        %v867 = vtanh.pop %v835
        %v868 = vtanh.pop %v836
        %v869 = vtanh.pop %v837
        %v870 = vtanh.pop %v838
        %v871 = vtanh.pop %v839
        %v872 = vtanh.pop %v840
        %v873 = vtanh.pop %v841
        %v874 = vtanh.pop %v842
        %v875 = vtanh.pop %v843
        %v876 = vtanh.pop %v844
        %v877 = vtanh.pop %v845
        %v878 = vadd.f32 %v846, 1.0
        %v879 = vadd.f32 %v847, 1.0
        %v880 = vadd.f32 %v848, 1.0
        %v881 = vadd.f32 %v849, 1.0
        %v882 = vadd.f32 %v850, 1.0
        %v883 = vadd.f32 %v851, 1.0
        %v884 = vadd.f32 %v852, 1.0
        %v885 = vadd.f32 %v853, 1.0
        %v886 = vadd.f32 %v854, 1.0
        %v887 = vadd.f32 %v855, 1.0
        %v888 = vadd.f32 %v856, 1.0
        %v889 = vadd.f32 %v857, 1.0
        %v890 = vadd.f32 %v858, 1.0
        %v891 = vadd.f32 %v859, 1.0
        %v892 = vadd.f32 %v860, 1.0
        %v893 = vadd.f32 %v861, 1.0
        %v894 = vadd.f32 %v862, 1.0
        %v895 = vadd.f32 %v863, 1.0
        %v896 = vadd.f32 %v864, 1.0
        %v897 = vadd.f32 %v865, 1.0
        %v898 = vadd.f32 %v866, 1.0
        %v899 = vadd.f32 %v867, 1.0
        %v900 = vadd.f32 %v868, 1.0
        %v901 = vadd.f32 %v869, 1.0
        %v902 = vadd.f32 %v870, 1.0
        %v903 = vadd.f32 %v871, 1.0
        %v904 = vadd.f32 %v872, 1.0
        %v905 = vadd.f32 %v873, 1.0
        %v906 = vadd.f32 %v874, 1.0
        %v907 = vadd.f32 %v875, 1.0
        %v908 = vadd.f32 %v876, 1.0
        %v909 = vadd.f32 %v877, 1.0
        %v910 = vmul.f32 %v878, 0.5
        %v911 = vmul.f32 %v879, 0.5
        %v912 = vmul.f32 %v880, 0.5
        %v913 = vmul.f32 %v881, 0.5
        %v914 = vmul.f32 %v882, 0.5
        %v915 = vmul.f32 %v883, 0.5
        %v916 = vmul.f32 %v884, 0.5
        %v917 = vmul.f32 %v885, 0.5
        %v918 = vmul.f32 %v886, 0.5
        %v919 = vmul.f32 %v887, 0.5
        %v920 = vmul.f32 %v888, 0.5
        %v921 = vmul.f32 %v889, 0.5
        %v922 = vmul.f32 %v890, 0.5
        %v923 = vmul.f32 %v891, 0.5
        %v924 = vmul.f32 %v892, 0.5
        %v925 = vmul.f32 %v893, 0.5
        %v926 = vmul.f32 %v894, 0.5
        %v927 = vmul.f32 %v895, 0.5
        %v928 = vmul.f32 %v896, 0.5
        %v929 = vmul.f32 %v897, 0.5
        %v930 = vmul.f32 %v898, 0.5
        %v931 = vmul.f32 %v899, 0.5
        %v932 = vmul.f32 %v900, 0.5
        %v933 = vmul.f32 %v901, 0.5
        %v934 = vmul.f32 %v902, 0.5
        %v935 = vmul.f32 %v903, 0.5
        %v936 = vmul.f32 %v904, 0.5
        %v937 = vmul.f32 %v905, 0.5
        %v938 = vmul.f32 %v906, 0.5
        %v939 = vmul.f32 %v907, 0.5
        %v940 = vmul.f32 %v908, 0.5
        %v941 = vmul.f32 %v909, 0.5
        %v942 = vmul.f32 %v511, %v910
        %v943 = vmul.f32 %v513, %v911
        %v944 = vmul.f32 %v515, %v912
        %v945 = vmul.f32 %v517, %v913
        %v946 = vmul.f32 %v521, %v914
        %v947 = vmul.f32 %v523, %v915
        %v948 = vmul.f32 %v525, %v916
        %v949 = vmul.f32 %v527, %v917
        %v950 = vmul.f32 %v531, %v918
        %v951 = vmul.f32 %v533, %v919
        %v952 = vmul.f32 %v535, %v920
        %v953 = vmul.f32 %v537, %v921
        %v954 = vmul.f32 %v541, %v922
        %v955 = vmul.f32 %v543, %v923
        %v956 = vmul.f32 %v545, %v924
        %v957 = vmul.f32 %v547, %v925
        %v958 = vmul.f32 %v551, %v926
        %v959 = vmul.f32 %v553, %v927
        %v960 = vmul.f32 %v555, %v928
        %v961 = vmul.f32 %v557, %v929
        %v962 = vmul.f32 %v561, %v930
        %v963 = vmul.f32 %v563, %v931
        %v964 = vmul.f32 %v565, %v932
        %v965 = vmul.f32 %v567, %v933
        %v966 = vmul.f32 %v571, %v934
        %v967 = vmul.f32 %v573, %v935
        %v968 = vmul.f32 %v575, %v936
        %v969 = vmul.f32 %v577, %v937
        %v970 = vmul.f32 %v581, %v938
        %v971 = vmul.f32 %v583, %v939
        %v972 = vmul.f32 %v585, %v940
        %v973 = vmul.f32 %v587, %v941
        %v974 = vxor.u32 %v624, 2147483648
        %v975 = vxor.u32 %v627, 2147483648
        %v976 = vxor.u32 %v632, 2147483648
        %v977 = vxor.u32 %v635, 2147483648
        %v978 = vxor.u32 %v640, 2147483648
        %v979 = vxor.u32 %v643, 2147483648
        %v980 = vxor.u32 %v648, 2147483648
        %v981 = vxor.u32 %v651, 2147483648
        %v982 = vxor.u32 %v656, 2147483648
        %v983 = vxor.u32 %v659, 2147483648
        %v984 = vxor.u32 %v664, 2147483648
        %v985 = vxor.u32 %v667, 2147483648
        %v986 = vxor.u32 %v672, 2147483648
        %v987 = vxor.u32 %v675, 2147483648
        %v988 = vxor.u32 %v680, 2147483648
        %v989 = vxor.u32 %v683, 2147483648
        %v990 = vmul.f32 %v974, 1.442695
        %v991 = vpow.pop %v990
        %v992 = vmul.f32 %v975, 1.442695
        %v993 = vpow.pop %v992
        %v994 = vmul.f32 %v976, 1.442695
        %v995 = vpow.pop %v994
        %v996 = vmul.f32 %v977, 1.442695
        %v997 = vpow.pop %v996
        %v998 = vmul.f32 %v978, 1.442695
        %v999 = vpow.pop %v998
        %v1000 = vmul.f32 %v979, 1.442695
        %v1001 = vpow.pop %v1000
        %v1002 = vmul.f32 %v980, 1.442695
        %v1003 = vpow.pop %v1002
        %v1004 = vmul.f32 %v981, 1.442695
        %v1005 = vpow.pop %v1004
        %v1006 = vmul.f32 %v982, 1.442695
        %v1007 = vpow.pop %v1006
        %v1008 = vmul.f32 %v983, 1.442695
        %v1009 = vpow.pop %v1008
        %v1010 = vmul.f32 %v984, 1.442695
        %v1011 = vpow.pop %v1010
        %v1012 = vmul.f32 %v985, 1.442695
        %v1013 = vpow.pop %v1012
        %v1014 = vmul.f32 %v986, 1.442695
        %v1015 = vpow.pop %v1014
        %v1016 = vmul.f32 %v987, 1.442695
        %v1017 = vpow.pop %v1016
        %v1018 = vmul.f32 %v988, 1.442695
        %v1019 = vpow.pop %v1018
        %v1020 = vmul.f32 %v989, 1.442695
        %v1021 = vpow.pop %v1020
        %v1022 = vadd.f32 %v991, 1.0
        %v1023 = vadd.f32 %v993, 1.0
        %v1024 = vadd.f32 %v995, 1.0
        %v1025 = vadd.f32 %v997, 1.0
        %v1026 = vadd.f32 %v999, 1.0
        %v1027 = vadd.f32 %v1001, 1.0
        %v1028 = vadd.f32 %v1003, 1.0
        %v1029 = vadd.f32 %v1005, 1.0
        %v1030 = vadd.f32 %v1007, 1.0
        %v1031 = vadd.f32 %v1009, 1.0
        %v1032 = vadd.f32 %v1011, 1.0
        %v1033 = vadd.f32 %v1013, 1.0
        %v1034 = vadd.f32 %v1015, 1.0
        %v1035 = vadd.f32 %v1017, 1.0
        %v1036 = vadd.f32 %v1019, 1.0
        %v1037 = vadd.f32 %v1021, 1.0
        %v1038 = vrcp.pop %v1022
        %v1039 = vmul.f32 1.0, %v1038
        %v1040 = vrcp.pop %v1023
        %v1041 = vmul.f32 1.0, %v1040
        %v1042 = vrcp.pop %v1024
        %v1043 = vmul.f32 1.0, %v1042
        %v1044 = vrcp.pop %v1025
        %v1045 = vmul.f32 1.0, %v1044
        %v1046 = vrcp.pop %v1026
        %v1047 = vmul.f32 1.0, %v1046
        %v1048 = vrcp.pop %v1027
        %v1049 = vmul.f32 1.0, %v1048
        %v1050 = vrcp.pop %v1028
        %v1051 = vmul.f32 1.0, %v1050
        %v1052 = vrcp.pop %v1029
        %v1053 = vmul.f32 1.0, %v1052
        %v1054 = vrcp.pop %v1030
        %v1055 = vmul.f32 1.0, %v1054
        %v1056 = vrcp.pop %v1031
        %v1057 = vmul.f32 1.0, %v1056
        %v1058 = vrcp.pop %v1032
        %v1059 = vmul.f32 1.0, %v1058
        %v1060 = vrcp.pop %v1033
        %v1061 = vmul.f32 1.0, %v1060
        %v1062 = vrcp.pop %v1034
        %v1063 = vmul.f32 1.0, %v1062
        %v1064 = vrcp.pop %v1035
        %v1065 = vmul.f32 1.0, %v1064
        %v1066 = vrcp.pop %v1036
        %v1067 = vmul.f32 1.0, %v1066
        %v1068 = vrcp.pop %v1037
        %v1069 = vmul.f32 1.0, %v1068
        %v1070 = vpack.c.bf16 %v944, %v942
        %v1071 = vpack.c.bf16 %v945, %v943
        %v1072 = vpack.c.bf16 %v948, %v946
        %v1073 = vpack.c.bf16 %v949, %v947
        %v1074 = vpack.c.bf16 %v952, %v950
        %v1075 = vpack.c.bf16 %v953, %v951
        %v1076 = vpack.c.bf16 %v956, %v954
        %v1077 = vpack.c.bf16 %v957, %v955
        %v1078 = vpack.c.bf16 %v960, %v958
        %v1079 = vpack.c.bf16 %v961, %v959
        %v1080 = vpack.c.bf16 %v964, %v962
        %v1081 = vpack.c.bf16 %v965, %v963
        %v1082 = vpack.c.bf16 %v968, %v966
        %v1083 = vpack.c.bf16 %v969, %v967
        %v1084 = vpack.c.bf16 %v972, %v970
        %v1085 = vpack.c.bf16 %v973, %v971
        %v1086 = vld [vmem:[#allocation7] sm:$0xf]
        %v1087 = vld [vmem:[#allocation7 + $0x4] sm:$0xf]
        %v1088 = vld [vmem:[#allocation7 + $0x8] sm:$0xf]
        %v1089 = vld [vmem:[#allocation7 + $0xc] sm:$0xf]
        %v1090 = vld [vmem:[#allocation7 + $0x10] sm:$0xf]
        %v1091 = vld [vmem:[#allocation7 + $0x14] sm:$0xf]
        %v1092 = vld [vmem:[#allocation7 + $0x18] sm:$0xf]
        %v1093 = vld [vmem:[#allocation7 + $0x1c] sm:$0xf]
        %v1094 = vld [vmem:[#allocation7 + $0x20] sm:$0xf]
        %v1095 = vld [vmem:[#allocation7 + $0x24] sm:$0xf]
        %v1096 = vld [vmem:[#allocation7 + $0x28] sm:$0xf]
        %v1097 = vld [vmem:[#allocation7 + $0x2c] sm:$0xf]
        %v1098 = vld [vmem:[#allocation7 + $0x30] sm:$0xf]
        %v1099 = vld [vmem:[#allocation7 + $0x34] sm:$0xf]
        %v1100 = vld [vmem:[#allocation7 + $0x38] sm:$0xf]
        %v1101 = vld [vmem:[#allocation7 + $0x3c] sm:$0xf]
        %v1102 = vld [vmem:[#allocation7 + $0x40] sm:$0xf]
        %v1103 = vld [vmem:[#allocation7 + $0x44] sm:$0xf]
        %v1104 = vld [vmem:[#allocation7 + $0x48] sm:$0xf]
        %v1105 = vld [vmem:[#allocation7 + $0x4c] sm:$0xf]
        %v1106 = vld [vmem:[#allocation7 + $0x50] sm:$0xf]
        %v1107 = vld [vmem:[#allocation7 + $0x54] sm:$0xf]
        %v1108 = vld [vmem:[#allocation7 + $0x58] sm:$0xf]
        %v1109 = vld [vmem:[#allocation7 + $0x5c] sm:$0xf]
        %v1110 = vld [vmem:[#allocation7 + $0x60] sm:$0xf]
        %v1111 = vld [vmem:[#allocation7 + $0x64] sm:$0xf]
        %v1112 = vld [vmem:[#allocation7 + $0x68] sm:$0xf]
        %v1113 = vld [vmem:[#allocation7 + $0x6c] sm:$0xf]
        %v1114 = vld [vmem:[#allocation7 + $0x70] sm:$0xf]
        %v1115 = vld [vmem:[#allocation7 + $0x74] sm:$0xf]
        %v1116 = vld [vmem:[#allocation7 + $0x78] sm:$0xf]
        %v1117 = vld [vmem:[#allocation7 + $0x7c] sm:$0xf]
        %v1118 = vld [vmem:[%s4] sm:$0x1]
        %v1120 = vlaneseq
        %v1121 = vshrl.u32 %v1120, 7
        %v1122 = vsub.s32 0, %v1121
        %v1123 = vrot.slane %v1118, %v1122
        %v1157 = vunpack.c.l.b16 %v1086
        %v1158 = vunpack.c.l.b16 %v1087
        %v1159 = vunpack.c.l.b16 %v1088
        %v1160 = vunpack.c.l.b16 %v1089
        %v1161 = vunpack.c.l.b16 %v1090
        %v1162 = vunpack.c.l.b16 %v1091
        %v1163 = vunpack.c.l.b16 %v1092
        %v1164 = vunpack.c.l.b16 %v1093
        %v1165 = vunpack.c.l.b16 %v1094
        %v1166 = vunpack.c.l.b16 %v1095
        %v1167 = vunpack.c.l.b16 %v1096
        %v1168 = vunpack.c.l.b16 %v1097
        %v1169 = vunpack.c.l.b16 %v1098
        %v1170 = vunpack.c.l.b16 %v1099
        %v1171 = vunpack.c.l.b16 %v1100
        %v1172 = vunpack.c.l.b16 %v1101
        %v1173 = vunpack.c.l.b16 %v1102
        %v1174 = vunpack.c.l.b16 %v1103
        %v1175 = vunpack.c.l.b16 %v1104
        %v1176 = vunpack.c.l.b16 %v1105
        %v1177 = vunpack.c.l.b16 %v1106
        %v1178 = vunpack.c.l.b16 %v1107
        %v1179 = vunpack.c.l.b16 %v1108
        %v1180 = vunpack.c.l.b16 %v1109
        %v1181 = vunpack.c.l.b16 %v1110
        %v1182 = vunpack.c.l.b16 %v1111
        %v1183 = vunpack.c.l.b16 %v1112
        %v1184 = vunpack.c.l.b16 %v1113
        %v1185 = vunpack.c.l.b16 %v1114
        %v1186 = vunpack.c.l.b16 %v1115
        %v1187 = vunpack.c.l.b16 %v1116
        %v1188 = vunpack.c.l.b16 %v1117
        %v1189 = vpack.c.b16 %v1158, %v1157
        %v1190 = vpack.c.b16 %v1160, %v1159
        %v1191 = vpack.c.b16 %v1162, %v1161
        %v1192 = vpack.c.b16 %v1164, %v1163
        %v1193 = vpack.c.b16 %v1166, %v1165
        %v1194 = vpack.c.b16 %v1168, %v1167
        %v1195 = vpack.c.b16 %v1170, %v1169
        %v1196 = vpack.c.b16 %v1172, %v1171
        %v1197 = vpack.c.b16 %v1174, %v1173
        %v1198 = vpack.c.b16 %v1176, %v1175
        %v1199 = vpack.c.b16 %v1178, %v1177
        %v1200 = vpack.c.b16 %v1180, %v1179
        %v1201 = vpack.c.b16 %v1182, %v1181
        %v1202 = vpack.c.b16 %v1184, %v1183
        %v1203 = vpack.c.b16 %v1186, %v1185
        %v1204 = vpack.c.b16 %v1188, %v1187
        %1221 = vmatprep.subr.bf16.mxu0 0
        %1222 = vmatpush1.bf16.msra.mxu0 %v1189
        %1223 = vmatprep.subr.bf16.mxu0 0
        %1224 = vmatpush1.bf16.msra.mxu0 %v1190
        %1225 = vmatprep.subr.bf16.mxu0 0
        %1226 = vmatpush1.bf16.msra.mxu0 %v1191
        %1227 = vmatprep.subr.bf16.mxu0 0
        %1228 = vmatpush1.bf16.msra.mxu0 %v1192
        %1229 = vmatprep.subr.bf16.mxu0 0
        %1230 = vmatpush1.bf16.msra.mxu0 %v1193
        %1231 = vmatprep.subr.bf16.mxu0 0
        %1232 = vmatpush1.bf16.msra.mxu0 %v1194
        %1233 = vmatprep.subr.bf16.mxu0 0
        %1234 = vmatpush1.bf16.msra.mxu0 %v1195
        %1235 = vmatprep.subr.bf16.mxu0 0
        %1236 = vmatpush1.bf16.msra.mxu0 %v1196
        %1237 = vmatprep.subr.bf16.mxu0 0
        %1238 = vmatpush1.bf16.msra.mxu0 %v1197
        %1239 = vmatprep.subr.bf16.mxu0 0
        %1240 = vmatpush1.bf16.msra.mxu0 %v1198
        %1241 = vmatprep.subr.bf16.mxu0 0
        %1242 = vmatpush1.bf16.msra.mxu0 %v1199
        %1243 = vmatprep.subr.bf16.mxu0 0
        %1244 = vmatpush1.bf16.msra.mxu0 %v1200
        %1245 = vmatprep.subr.bf16.mxu0 0
        %1246 = vmatpush1.bf16.msra.mxu0 %v1201
        %1247 = vmatprep.subr.bf16.mxu0 0
        %1248 = vmatpush1.bf16.msra.mxu0 %v1202
        %1249 = vmatprep.subr.bf16.mxu0 0
        %1250 = vmatpush1.bf16.msra.mxu0 %v1203
        %1251 = vmatprep.subr.bf16.mxu0 0
        %1252 = vmatpush1.bf16.msra.mxu0 %v1204
        %1253 = vmatprep.mubr.bf16.mxu0 %v1071
        %1254 = vmatmul.mubr.bf16.gmra.mrb[0].mxu0 %v1070
        %v1255 = vpop.f32.mrb[0].mxu0
        %v1256 = vadd.f32 %v1123, %v1255
        %v1257 = vpop.f32.mrb[0].mxu0
        %v1258 = vpop.f32.mrb[0].mxu0
        %v1259 = vadd.f32 %v1123, %v1258
        %v1260 = vpop.f32.mrb[0].mxu0
        %1261 = vmatprep.mubr.bf16.mxu0 %v1073
        %1262 = vmatmul.mubr.bf16.gmra.mrb[0].mxu0 %v1072
        %v1263 = vpop.f32.mrb[0].mxu0
        %v1264 = vadd.f32 %v1123, %v1263
        %v1265 = vpop.f32.mrb[0].mxu0
        %v1266 = vpop.f32.mrb[0].mxu0
        %v1267 = vadd.f32 %v1123, %v1266
        %v1268 = vpop.f32.mrb[0].mxu0
        %1269 = vmatprep.mubr.bf16.mxu0 %v1075
        %1270 = vmatmul.mubr.bf16.gmra.mrb[0].mxu0 %v1074
        %v1271 = vpop.f32.mrb[0].mxu0
        %v1272 = vadd.f32 %v1123, %v1271
        %v1273 = vpop.f32.mrb[0].mxu0
        %v1274 = vpop.f32.mrb[0].mxu0
        %v1275 = vadd.f32 %v1123, %v1274
        %v1276 = vpop.f32.mrb[0].mxu0
        %1277 = vmatprep.mubr.bf16.mxu0 %v1077
        %1278 = vmatmul.mubr.bf16.gmra.mrb[0].mxu0 %v1076
        %v1279 = vpop.f32.mrb[0].mxu0
        %v1280 = vadd.f32 %v1123, %v1279
        %v1281 = vpop.f32.mrb[0].mxu0
        %v1282 = vpop.f32.mrb[0].mxu0
        %v1283 = vadd.f32 %v1123, %v1282
        %v1284 = vpop.f32.mrb[0].mxu0
        %1285 = vmatprep.mubr.bf16.mxu0 %v1079
        %1286 = vmatmul.mubr.bf16.gmra.mrb[0].mxu0 %v1078
        %v1287 = vpop.f32.mrb[0].mxu0
        %v1288 = vadd.f32 %v1123, %v1287
        %v1289 = vpop.f32.mrb[0].mxu0
        %v1290 = vpop.f32.mrb[0].mxu0
        %v1291 = vadd.f32 %v1123, %v1290
        %v1292 = vpop.f32.mrb[0].mxu0
        %1293 = vmatprep.mubr.bf16.mxu0 %v1081
        %1294 = vmatmul.mubr.bf16.gmra.mrb[0].mxu0 %v1080
        %v1295 = vpop.f32.mrb[0].mxu0
        %v1296 = vadd.f32 %v1123, %v1295
        %v1297 = vpop.f32.mrb[0].mxu0
        %v1298 = vpop.f32.mrb[0].mxu0
        %v1299 = vadd.f32 %v1123, %v1298
        %v1300 = vpop.f32.mrb[0].mxu0
        %1301 = vmatprep.mubr.bf16.mxu0 %v1083
        %1302 = vmatmul.mubr.bf16.gmra.mrb[0].mxu0 %v1082
        %v1303 = vpop.f32.mrb[0].mxu0
        %v1304 = vadd.f32 %v1123, %v1303
        %v1305 = vpop.f32.mrb[0].mxu0
        %v1306 = vpop.f32.mrb[0].mxu0
        %v1307 = vadd.f32 %v1123, %v1306
        %v1308 = vpop.f32.mrb[0].mxu0
        %1309 = vmatprep.mubr.bf16.mxu0 %v1085
        %1310 = vmatmul.mubr.bf16.gmra.mrb[0].mxu0 %v1084
        %v1311 = vpop.f32.mrb[0].mxu0
        %v1312 = vadd.f32 %v1123, %v1311
        %v1313 = vpop.f32.mrb[0].mxu0
        %v1314 = vpop.f32.mrb[0].mxu0
        %v1315 = vadd.f32 %v1123, %v1314
        %v1316 = vpop.f32.mrb[0].mxu0
        %1317 = vdwg.mxu0
        %v1318 = vsub.f32 %v1256, %v275
        %v1319 = vsub.f32 %v1259, %v276
        %v1320 = vsub.f32 %v1264, %v277
        %v1321 = vsub.f32 %v1267, %v278
        %v1322 = vsub.f32 %v1272, %v279
        %v1323 = vsub.f32 %v1275, %v280
        %v1324 = vsub.f32 %v1280, %v281
        %v1325 = vsub.f32 %v1283, %v282
        %v1326 = vsub.f32 %v1288, %v283
        %v1327 = vsub.f32 %v1291, %v284
        %v1328 = vsub.f32 %v1296, %v285
        %v1329 = vsub.f32 %v1299, %v286
        %v1330 = vsub.f32 %v1304, %v287
        %v1331 = vsub.f32 %v1307, %v288
        %v1332 = vsub.f32 %v1312, %v289
        %v1333 = vsub.f32 %v1315, %v290
        %v1334 = vmul.f32 %v1039, %v1318
        %v1335 = vmul.f32 %v1041, %v1319
        %v1336 = vmul.f32 %v1043, %v1320
        %v1337 = vmul.f32 %v1045, %v1321
        %v1338 = vmul.f32 %v1047, %v1322
        %v1339 = vmul.f32 %v1049, %v1323
        %v1340 = vmul.f32 %v1051, %v1324
        %v1341 = vmul.f32 %v1053, %v1325
        %v1342 = vmul.f32 %v1055, %v1326
        %v1343 = vmul.f32 %v1057, %v1327
        %v1344 = vmul.f32 %v1059, %v1328
        %v1345 = vmul.f32 %v1061, %v1329
        %v1346 = vmul.f32 %v1063, %v1330
        %v1347 = vmul.f32 %v1065, %v1331
        %v1348 = vmul.f32 %v1067, %v1332
        %v1349 = vmul.f32 %v1069, %v1333
        %v1350 = vadd.f32 %v275, %v1334
        %v1351 = vadd.f32 %v276, %v1335
        %v1352 = vadd.f32 %v277, %v1336
        %v1353 = vadd.f32 %v278, %v1337
        %v1354 = vadd.f32 %v279, %v1338
        %v1355 = vadd.f32 %v280, %v1339
        %v1356 = vadd.f32 %v281, %v1340
        %v1357 = vadd.f32 %v282, %v1341
        %v1358 = vadd.f32 %v283, %v1342
        %v1359 = vadd.f32 %v284, %v1343
        %v1360 = vadd.f32 %v285, %v1344
        %v1361 = vadd.f32 %v286, %v1345
        %v1362 = vadd.f32 %v287, %v1346
        %v1363 = vadd.f32 %v288, %v1347
        %v1364 = vadd.f32 %v289, %v1348
        %v1365 = vadd.f32 %v290, %v1349
        %1366 = vst [vmem:[%s271] sm:$0xff] %v1350
        %1367 = vst [vmem:[%s271 + $0x8] sm:$0xff] %v1351
        %1368 = vst [vmem:[%s271 + $0x10] sm:$0xff] %v1352
        %1369 = vst [vmem:[%s271 + $0x18] sm:$0xff] %v1353
        %1370 = vst [vmem:[%s271 + $0x20] sm:$0xff] %v1354
        %1371 = vst [vmem:[%s271 + $0x28] sm:$0xff] %v1355
        %1372 = vst [vmem:[%s271 + $0x30] sm:$0xff] %v1356
        %1373 = vst [vmem:[%s271 + $0x38] sm:$0xff] %v1357
        %1374 = vst [vmem:[%s271 + $0x40] sm:$0xff] %v1358
        %1375 = vst [vmem:[%s271 + $0x48] sm:$0xff] %v1359
        %1376 = vst [vmem:[%s271 + $0x50] sm:$0xff] %v1360
        %1377 = vst [vmem:[%s271 + $0x58] sm:$0xff] %v1361
        %1378 = vst [vmem:[%s271 + $0x60] sm:$0xff] %v1362
        %1379 = vst [vmem:[%s271 + $0x68] sm:$0xff] %v1363
        %1380 = vst [vmem:[%s271 + $0x70] sm:$0xff] %v1364
        %1381 = vst [vmem:[%s271 + $0x78] sm:$0xff] %v1365
        %s1382 = sand.u32 %s141, 1
        %s1383 = scalar_lea.sflag [#allocation4], %s1382
        %s1384 = sand.u32 %s141, 1
        %s1385 = smul.addr %s1384, 128
        %s1386 = scalar_lea.vmem [#allocation8], %s1385
        // Predicated region
        $region53: #{tpu_custom_call.1} parent=39 // pred_check
          %p1387 = pneg %p151
        $region54: #{tpu_custom_call.1} parent=39 // pred_check_branch
          %1389 = sbr.rel (%p1387) target = $region56
        $region55: #{tpu_custom_call.1} parent=39 // pred_region
          %s1390 = smul.u32 16, %s23
          %s1392 = ssub.s32 2048, 2048
          %1393 = vsyncadd %s1383, %s1392
          %s1394 = smul.addr %s1390, 128
          %s1395 = scalar_lea.hbm %s5, %s1394
          %s1396 = sshll.u32 %s1386, 4
          %s1397 = int_to_ptr.vmem [resolvable:$true] %s1396
          %1402 = dma.vmem_to_hbm [thread:$0]  %s1397, 2048, %s1395, %s1383, 128, 128, 8
        $region56: #{tpu_custom_call.1} parent=39 // pred_fallthru
          _
      $region40: #{tpu_custom_call.1} parent=5 // pred_fallthru
        _
      %p1403 = scmp.le.s32.totalorder 2, %s18
      // Predicated region
      $region57: #{tpu_custom_call.1} parent=5 // pred_check
        %p1404 = pneg %p1403
      $region58: #{tpu_custom_call.1} parent=5 // pred_check_branch
        %1406 = sbr.rel (%p1404) target = $region60
      $region59: #{tpu_custom_call.1} parent=5 // pred_region
        %s1407 = ssub.s32 %s18, 2
        // Predicated region
        $region61: #{tpu_custom_call.1} parent=59 // pred_check
          %p1408 = pneg %p157
        $region62: #{tpu_custom_call.1} parent=59 // pred_check_branch
          %1410 = sbr.rel (%p1408) target = $region64
        $region63: #{tpu_custom_call.1} parent=59 // pred_region
          %s1411 = sand.u32 %s142, 1
          %s1412 = scalar_lea.sflag [#allocation4], %s1411
          %s1413 = sand.u32 %s142, 1
          %s1414 = smul.addr %s1413, 128
          %s1415 = scalar_lea.vmem [#allocation8], %s1414
          %1416 = dma.done %s1412, 2048
        $region64: #{tpu_custom_call.1} parent=59 // pred_fallthru
          _
      $region60: #{tpu_custom_call.1} parent=5 // pred_fallthru
        _
    $region6: #{tpu_custom_call.1} parent=1 // loop_footer
      %s22 = sadd.s32 1, %s18
    $region7: #{tpu_custom_call.1} parent=1 // loop_footer_branch
      %17 = sbr.rel target = $region3
    $region8: #{tpu_custom_call.1} parent=1 // loop_exit
      _
    %1417 = vsyncpa [#allocation3], 1
    %s1418 = scalar_lea.sflag [#allocation3], 1
    %1419 = vsyncpa %s1418, 1
    %1420 = vsyncpa [#allocation6], 1
    %1421 = vsyncpa [#allocation4], 1
    %s1422 = scalar_lea.sflag [#allocation4], 1
    %1423 = vsyncpa %s1422, 1

</llo_original>
